<compile_context>
chip_gen: v6e
topology: v6e:2x2x1
jax: 0.10.0
libtpu: 0.0.40
codegen_flags: <defaults>
</compile_context>

<pallas_src>
import functools

import jax
import jax.numpy as jnp
from jax import lax
from jax.experimental import pallas as pl
from jax.experimental.pallas import tpu as pltpu


def _round_up(x, m):
    return (x + m - 1) // m * m


def _pick_tile(dim, max_tile, align):
    """Largest aligned tile <= max_tile that does not grossly over-pad `dim`.

    Splits dim into ceil(dim/max_tile) blocks and rounds the block size up to
    `align`, so e.g. m=300 -> tile 304 (not padded to 512) and m=520 ->
    tile 264 (padded to 528, not 1024).
    """
    dim = max(int(dim), 1)
    n_blocks = -(-dim // max_tile)            # ceil
    return _round_up(-(-dim // n_blocks), align)


def _mix_bits(x):
    """lowbias32-style 2-round uint32 hash (pure VPU ops, lowers everywhere)."""
    x = x ^ (x >> jnp.uint32(16))
    x = x * jnp.uint32(0x7FEB352D)
    x = x ^ (x >> jnp.uint32(15))
    x = x * jnp.uint32(0x846CA68B)
    x = x ^ (x >> jnp.uint32(16))
    return x


def _up_kernel(seed_ref, x_ref, w_ref, b_ref, o_ref, *acc_scratch,
               p, training, n_padded):
    # f32 outputs: accumulate straight into the K-resident output block.
    acc_ref = acc_scratch[0] if acc_scratch else o_ref

    # NOTE: program_id / num_programs / SMEM reads hoisted OUT of pl.when
    # bodies (no lowering for program_id inside a cond branch on the
    # CPU/interpret fallback path).
    i = pl.program_id(0)
    j = pl.program_id(1)
    k = pl.program_id(2)
    k_last = pl.num_programs(2) - 1
    seed_u = seed_ref[0].astype(jnp.uint32)

    @pl.when(k == 0)
    def _init():
        acc_ref[...] = jnp.zeros_like(acc_ref)

    # acc += x_tile @ w_tile, weight already in (K, N) layout -> clean
    # (M,K)x(K,N) MXU contraction, no per-tile transpose.
    acc_ref[...] += lax.dot_general(
        x_ref[...], w_ref[...],
        dimension_numbers=(((1,), (0,)), ((), ())),
        preferred_element_type=jnp.float32,
    )

    @pl.when(k == k_last)
    def _finalize():
        y = acc_ref[...].astype(jnp.float32) + b_ref[...].astype(jnp.float32)

        if training and p > 0.0:
            tm, tn = y.shape
            # Counter = global element index (tiling-invariant for fixed
            # padded N).  Row-stride multiply only touches a (tm, 1) column.
            row = lax.broadcasted_iota(jnp.int32, (tm, 1), 0) + i * tm
            row_term = row.astype(jnp.uint32) * jnp.uint32(n_padded)
            col = (lax.broadcasted_iota(jnp.int32, (1, tn), 1) + j * tn
                   ).astype(jnp.uint32)
            ctr = row_term + col + seed_u * jnp.uint32(0x9E3779B9)
            bits = _mix_bits(ctr)
            # keep iff U(0,1) < 1-p  <=>  bits < (1-p) * 2^32
            thresh = min(int((1.0 - p) * 4294967296.0), 4294967295)
            keep = bits < jnp.uint32(thresh)
            y = jnp.where(keep, y * jnp.float32(1.0 / (1.0 - p)),
                          jnp.float32(0.0))

        o_ref[...] = y.astype(o_ref.dtype)


def make_up(weight, bias, *, p=0.5, tm_max=512, tn_max=512, tk_max=1024,
            operand_dtype=None):
    """Build the forward fn for Up: Dropout(Linear(x)).

    weight: (out_length, in_length) in torch nn.Linear layout.  It is
    transposed to (in, out) and padded ONCE here, outside the per-call
    hot path.  operand_dtype=jnp.bfloat16 optionally casts the matmul
    operands (f32 accumulation is kept).
    """
    n, k_dim = weight.shape
    sub_align = 16 if operand_dtype == jnp.bfloat16 else 8

    tn = _pick_tile(n, tn_max, 128)
    tk = _pick_tile(k_dim, tk_max, 128)
    np_ = _round_up(n, tn)
    kp = _round_up(k_dim, tk)

    w_kn = weight.T                                   # (K, N) MXU layout
    if operand_dtype is not None:
        w_kn = w_kn.astype(operand_dtype)
    if (kp, np_) != (k_dim, n):
        w_kn = jnp.pad(w_kn, ((0, kp - k_dim), (0, np_ - n)))
    b_row = bias if np_ == n else jnp.pad(bias, (0, np_ - n))
    b_row = b_row.reshape(1, np_)

    def forward(x, *, seed=0, training=True):
        m, kx = x.shape
        assert kx == k_dim, (kx, k_dim)
        out_dtype = x.dtype

        tm = _pick_tile(m, tm_max, sub_align)
        mp = _round_up(m, tm)

        xp = x if operand_dtype is None else x.astype(operand_dtype)
        if (mp, kp) != (m, k_dim):                    # skip pad when aligned
            xp = jnp.pad(xp, ((0, mp - m), (0, kp - k_dim)))

        seed_arr = jnp.asarray([seed], dtype=jnp.int32)

        use_scratch = out_dtype != jnp.float32
        scratch_shapes = ([pltpu.VMEM((tm, tn), jnp.float32)]
                          if use_scratch else [])

        # Double-buffered footprint estimate -> explicit VMEM limit (v5e's
        # scoped default is only 16 MiB; cap well under v7x's 64 MiB phys).
        est = (2 * tm * tk * xp.dtype.itemsize
               + 2 * tk * tn * w_kn.dtype.itemsize
               + 2 * tm * tn * out_dtype.itemsize
               + 2 * tn * b_row.dtype.itemsize
               + (tm * tn * 4 if use_scratch else 0))
        vmem_limit = int(min(max(2 * est, 32 * 1024 * 1024),
                             48 * 1024 * 1024))

        kernel = functools.partial(_up_kernel, p=p, training=training,
                                   n_padded=np_)

        # (Further option for tiny-batch, weight-BW-bound shapes:
        #  pipeline_mode=pl.Buffered(3) on the weight spec.)
        out = pl.pallas_call(
            kernel,
            out_shape=jax.ShapeDtypeStruct((mp, np_), out_dtype),
            grid_spec=pltpu.PrefetchScalarGridSpec(
                num_scalar_prefetch=1,                          # seed -> SMEM
                grid=(mp // tm, np_ // tn, kp // tk),
                in_specs=[
                    pl.BlockSpec((tm, tk), lambda i, j, k, s: (i, k)),  # x
                    pl.BlockSpec((tk, tn), lambda i, j, k, s: (k, j)),  # W^T
                    pl.BlockSpec((1, tn), lambda i, j, k, s: (0, j)),   # bias
                ],
                out_specs=pl.BlockSpec((tm, tn), lambda i, j, k, s: (i, j)),
                scratch_shapes=scratch_shapes,
            ),
            compiler_params=pltpu.CompilerParams(
                dimension_semantics=("parallel", "parallel", "arbitrary"),
                vmem_limit_bytes=vmem_limit),
        )(seed_arr, xp, w_kn, b_row)

        return out[:m, :n]

    return forward


def up_forward(x, weight, bias, *, seed=0, p=0.5, training=True, **tile_kw):
    """Convenience one-shot API (prefers make_up for repeated calls)."""
    return make_up(weight, bias, p=p, **tile_kw)(x, seed=seed,
                                                 training=training)


def init_up_params(key, in_length, out_length, dtype=jnp.float32):
    """Mirror nn.Linear's default init U(-1/sqrt(in), 1/sqrt(in))."""
    kw, kb = jax.random.split(key)
    bound = 1.0 / float(in_length) ** 0.5
    weight = jax.random.uniform(kw, (out_length, in_length), dtype=dtype,
                                minval=-bound, maxval=bound)
    bias = jax.random.uniform(kb, (out_length,), dtype=dtype,
                              minval=-bound, maxval=bound)
    return weight, bias


if __name__ == "__main__":
    key = jax.random.PRNGKey(0)
    k_x, k_p = jax.random.split(key)

    batch, in_length, out_length = 16, 1024, 512
    x = jax.random.normal(k_x, (batch, in_length), dtype=jnp.float32)
    weight, bias = init_up_params(k_p, in_length, out_length)

    ref = jnp.dot(x, weight.T, precision=lax.Precision.HIGHEST) + bias

    # Tile maxes lowered here only so the small example exercises a
    # (1, 2, 2) grid; production defaults are 512/512/1024.
    up = make_up(weight, bias, p=0.5, tn_max=256, tk_max=512)

    # Eval mode: dropout is identity -> must match the plain linear layer.
    out_eval = jax.block_until_ready(up(x, training=False))
    assert out_eval.shape == (batch, out_length)
    assert jnp.allclose(out_eval, ref, atol=5e-3, rtol=5e-3), "linear mismatch"

    # Training mode: every element is either 0 (dropped) or ~2x the linear
    # output (kept and scaled by 1/(1-p) with p=0.5).
    out_train = jax.block_until_ready(up(x, seed=0, training=True))
    assert out_train.shape == (batch, out_length)
    err = jnp.minimum(jnp.abs(out_train), jnp.abs(out_train - 2.0 * ref))
    assert float(err.max()) < 2e-2, "dropout output is not {0, 2*linear}"
    keep_frac = float(jnp.mean(out_train != 0.0))
    assert 0.35 < keep_frac < 0.65, f"keep fraction {keep_frac} far from 0.5"

    print("KERNEL_OK")
</pallas_src>

<mosaic_0001>
module attributes {stable_mosaic.version = 11 : i64} {
  func.func @_up_kernel(%arg0: i32, %arg1: i32, %arg2: i32, %arg3: memref<1xi32, #tpu.memory_space<smem>>, %arg4: memref<16x512xf32, #tpu.memory_space<vmem>>, %arg5: memref<512x256xf32, #tpu.memory_space<vmem>>, %arg6: memref<1x256xf32, #tpu.memory_space<vmem>>, %arg7: memref<16x256xf32, #tpu.memory_space<vmem>>) attributes {dimension_semantics = [#tpu.dimension_semantics<parallel>, #tpu.dimension_semantics<parallel>, #tpu.dimension_semantics<arbitrary>], iteration_bounds = array<i64: 1, 2, 2>, scalar_prefetch = 1 : i64, scratch_operands = 0 : i64, tpu.core_type = #tpu.core_type<tc>, window_params = [{transform_indices = @transform_0, window_bounds = array<i64: 16, 512>}, {transform_indices = @transform_1, window_bounds = array<i64: 512, 256>}, {transform_indices = @transform_2, window_bounds = array<i64: 1, 256>}, {transform_indices = @transform_3, window_bounds = array<i64: 16, 256>}]} {
    %c0_i32 = arith.constant 0 : i32
    %0 = arith.cmpi eq, %arg2, %c0_i32 : i32
    %1 = arith.extui %0 : i1 to i32
    %c0_i32_0 = arith.constant 0 : i32
    %2 = arith.cmpi ne, %1, %c0_i32_0 : i32
    scf.if %2 {
      %cst_9 = arith.constant 0.000000e+00 : f32
      %12 = vector.broadcast %cst_9 : f32 to vector<16x256xf32>
      %c0_10 = arith.constant 0 : index
      %c0_11 = arith.constant 0 : index
      %13 = vector.load %arg7[%c0_10, %c0_11] : memref<16x256xf32, #tpu.memory_space<vmem>>, vector<16x256xf32>
      tpu.vector_store %arg7[%c0_10, %c0_11], %12 {strides = array<i32>} : memref<16x256xf32, #tpu.memory_space<vmem>>, vector<16x256xf32>,
    } else {
    }
    %c0 = arith.constant 0 : index
    %c0_1 = arith.constant 0 : index
    %3 = vector.load %arg7[%c0, %c0_1] : memref<16x256xf32, #tpu.memory_space<vmem>>, vector<16x256xf32>
    %c0_2 = arith.constant 0 : index
    %c0_3 = arith.constant 0 : index
    %4 = vector.load %arg4[%c0_2, %c0_3] : memref<16x512xf32, #tpu.memory_space<vmem>>, vector<16x512xf32>
    %c0_4 = arith.constant 0 : index
    %c0_5 = arith.constant 0 : index
    %5 = vector.load %arg5[%c0_4, %c0_5] : memref<512x256xf32, #tpu.memory_space<vmem>>, vector<512x256xf32>
    %cst = arith.constant dense<0.000000e+00> : vector<16x256xf32>
    %6 = tpu.matmul %4, %5, %cst {dimension_numbers = #tpu.dot_dimension_numbers<[1], [0], [0], [1], [0, 0, 1, 1], [], []>} : vector<16x512xf32>, vector<512x256xf32>, vector<16x256xf32> -> vector<16x256xf32>
    %7 = arith.addf %3, %6 : vector<16x256xf32>
    %c0_6 = arith.constant 0 : index
    %c0_7 = arith.constant 0 : index
    %8 = vector.load %arg7[%c0_6, %c0_7] : memref<16x256xf32, #tpu.memory_space<vmem>>, vector<16x256xf32>
    tpu.vector_store %arg7[%c0_6, %c0_7], %7 {strides = array<i32>} : memref<16x256xf32, #tpu.memory_space<vmem>>, vector<16x256xf32>,
    %c1_i32 = arith.constant 1 : i32
    %9 = arith.cmpi eq, %arg2, %c1_i32 : i32
    %10 = arith.extui %9 : i1 to i32
    %c0_i32_8 = arith.constant 0 : i32
    %11 = arith.cmpi ne, %10, %c0_i32_8 : i32
    scf.if %11 {
      %c0_9 = arith.constant 0 : index
      %c0_10 = arith.constant 0 : index
      %12 = vector.load %arg7[%c0_9, %c0_10] : memref<16x256xf32, #tpu.memory_space<vmem>>, vector<16x256xf32>
      %c0_11 = arith.constant 0 : index
      %c0_12 = arith.constant 0 : index
      %13 = vector.load %arg6[%c0_11, %c0_12] : memref<1x256xf32, #tpu.memory_space<vmem>>, vector<1x256xf32>
      %14 = vector.broadcast %13 : vector<1x256xf32> to vector<16x256xf32>
      %15 = arith.addf %12, %14 : vector<16x256xf32>
      %c0_13 = arith.constant 0 : index
      %c0_14 = arith.constant 0 : index
      %16 = vector.load %arg7[%c0_13, %c0_14] : memref<16x256xf32, #tpu.memory_space<vmem>>, vector<16x256xf32>
      tpu.vector_store %arg7[%c0_13, %c0_14], %15 {strides = array<i32>} : memref<16x256xf32, #tpu.memory_space<vmem>>, vector<16x256xf32>,
    } else {
    }
    return
  }
  func.func @transform_0(%arg0: i32, %arg1: i32, %arg2: i32, %arg3: memref<1xi32, #tpu.memory_space<smem>>) -> (i32, i32) {
    %c0_i32 = arith.constant 0 : i32
    return %arg0, %arg2 : i32, i32
  }
  func.func @transform_1(%arg0: i32, %arg1: i32, %arg2: i32, %arg3: memref<1xi32, #tpu.memory_space<smem>>) -> (i32, i32) {
    %c0_i32 = arith.constant 0 : i32
    return %arg2, %arg1 : i32, i32
  }
  func.func @transform_2(%arg0: i32, %arg1: i32, %arg2: i32, %arg3: memref<1xi32, #tpu.memory_space<smem>>) -> (i32, i32) {
    %c0_i32 = arith.constant 0 : i32
    %c0_i32_0 = arith.constant 0 : i32
    return %c0_i32, %arg1 : i32, i32
  }
  func.func @transform_3(%arg0: i32, %arg1: i32, %arg2: i32, %arg3: memref<1xi32, #tpu.memory_space<smem>>) -> (i32, i32) {
    %c0_i32 = arith.constant 0 : i32
    return %arg0, %arg1 : i32, i32
  }
}

</mosaic_0001>

<llo_original>
// kernel: tpu_custom_call.1
$region0: #{tpu_custom_call.1}
  #allocation0 [shape = 'u32[]', space=smem, size = 0x4, offset = 0x4, fixed_abs, tag = 'smem constant byte address 0x4 - core index']
  #allocation1 [shape = 'u32[144,128]{1,0:T(1,128)}', space=vmem, size = 0x12000, scoped, tag = 'internal scratch']
  #allocation2 [shape = 's32[1]{0}', space=sflag, size = 0x4, scoped, tag = 'scoped memory for tpu_custom_call.1']
  #allocation3 [shape = 's32[1]{0:T(128)S(6)}', space=smem, size = 0x200, scoped, tag = 'prefetched SMEM operand 0']
  %s0 = inlined_call_operand.<no memory space> [shape: s32[1], index: 0, kind: input, shape index: {}]
  %s1 = inlined_call_operand.hbm [shape: f32[16,1024], index: 1, kind: input, shape index: {}]
  %s2 = inlined_call_operand.hbm [shape: f32[1024,512], index: 2, kind: input, shape index: {}]
  %s3 = inlined_call_operand.hbm [shape: f32[1,512], index: 3, kind: input, shape index: {}]
  %s4 = inlined_call_operand.hbm [shape: f32[16,512], index: 4, kind: output, shape index: {}]
  %s5 = sld [smem:[#allocation0]]
  $region65: #{tpu_custom_call.1} parent=0
    _
  %s7 = ssub.s32 1, %s5
  %s8 = scalar_select 0, %s7, %s5
  %9 = sst [smem:[#allocation3]] %s0
  $region1: #{tpu_custom_call.1} parent=0
    #allocation4 [shape = 'u8[65536]{0}', space=vmem, size = 0x10000, scoped, tag = 'input window, operand 1']
    #allocation5 [shape = 's32[2]{0}', space=sflag, size = 0x8, scoped, tag = 'scoped memory for tpu_custom_call.1']
    #allocation6 [shape = 's32[2]{0}', space=sflag, size = 0x8, scoped, tag = 'scoped memory for tpu_custom_call.1']
    #allocation7 [shape = 'u8[1048576]{0}', space=vmem, size = 0x100000, scoped, tag = 'input window, operand 2']
    #allocation8 [shape = 's32[2]{0}', space=sflag, size = 0x8, scoped, tag = 'scoped memory for tpu_custom_call.1']
    #allocation9 [shape = 'u8[2048]{0}', space=vmem, size = 0x800, scoped, tag = 'input window, operand 3']
    #allocation10 [shape = 'u8[32768]{0}', space=vmem, size = 0x8000, scoped, tag = 'output window, operand 0']
    %10 = vsyncpa [#allocation5], 0
    %s11 = scalar_lea.sflag [#allocation5], 1
    %12 = vsyncpa %s11, 0
    %13 = vsyncpa [#allocation8], 0
    %s14 = scalar_lea.sflag [#allocation8], 1
    %15 = vsyncpa %s14, 0
    %16 = vsyncpa [#allocation6], 0
    %s17 = scalar_lea.sflag [#allocation6], 1
    %18 = vsyncpa %s17, 0
    loop: start=0, step=1, limit=6
    $region2: #{tpu_custom_call.1} parent=1 // loop_pre_header
      _
    $region3: #{tpu_custom_call.1} parent=1 // loop_header
      %s20 = sphi 0, %s24
      %p21 = scmp.ge.s32.totalorder %s20, 6
      %s27 = sphi 0, %s46
      %s28 = sphi 0, %s42
      %s29 = sphi 0, %s38
      %s30 = sphi 0, %s27
      %s31 = sphi 0, %s28
      %s32 = sphi 0, %s29
      %s33 = sphi 0, %s30
      %s34 = sphi 0, %s31
      %s35 = sphi 0, %s32
      %s51 = sphi 0, %s53
      %s54 = sphi 0, %s51
      %s55 = sphi 0, %s54
      %s71 = sphi 0, %s55
      %s79 = sphi 0, %s81
      %s82 = sphi 0, %s79
      %s83 = sphi 0, %s82
      %s99 = sphi 0, %s83
      %s105 = sphi 0, %s107
      %s108 = sphi 0, %s105
      %s109 = sphi 0, %s108
      %s125 = sphi 0, %s109
      %s133 = sphi 0, %s135
      %s136 = sphi 0, %s133
      %s137 = sphi 0, %s136
      %s153 = sphi 0, %s137
    $region4: #{tpu_custom_call.1} parent=1 // loop_header_branch
      %23 = sbr.rel (%p21) target = $region8
    $region5: #{tpu_custom_call.1} parent=1 // loop_body
      %s25 = ssub.s32 %s20, 1
      %s26 = ssub.s32 %s20, 2
      %s36 = sadd.s32 1, %s29
      %p37 = scmp.ge.s32.totalorder %s36, 2
      %s38 = scalar_select %p37, 0, %s36
      %s39 = sadd.s32 1, %s28
      %s40 = scalar_select %p37, %s39, %s28
      %p41 = scmp.ge.s32.totalorder %s40, 2
      %s42 = scalar_select %p41, 0, %s40
      %s43 = sadd.s32 1, %s27
      %s44 = scalar_select %p41, %s43, %s27
      %p45 = scmp.ge.s32.totalorder %s44, 1
      %s46 = scalar_select %p45, 0, %s44
      %s47 = ssub.s32 %s27, %s46
      %s48 = ssub.s32 %s29, %s38
      %s49 = sor.u32 %s47, %s48
      %p50 = scmp.eq.s32.totalorder %s49, 0
      %s52 = sadd.s32 %s51, 1
      %s53 = scalar_select %p50, %s51, %s52
      %p56 = pneg %p50
      %p57 = scmp.eq.s32.totalorder %s20, 3
      %p58 = por %p56, %p57
      %p59 = scmp.ne.s32.totalorder %s51, %s54
      %p60 = scmp.eq.s32.totalorder %s20, 0
      %p61 = por %p59, %p60
      %p62 = scmp.ne.s32.totalorder %s51, %s54
      %p63 = scmp.eq.s32.totalorder %s25, 3
      %p64 = por %p62, %p63
      %p65 = scmp.ne.s32.totalorder %s54, %s55
      %p66 = scmp.eq.s32.totalorder %s25, 0
      %p67 = por %p65, %p66
      %p68 = scmp.ne.s32.totalorder %s54, %s55
      %p69 = scmp.eq.s32.totalorder %s26, 3
      %p70 = por %p68, %p69
      %p72 = scmp.ne.s32.totalorder %s55, %s71
      %p73 = scmp.eq.s32.totalorder %s26, 0
      %p74 = por %p72, %p73
      %s75 = ssub.s32 %s29, %s38
      %s76 = ssub.s32 %s28, %s42
      %s77 = sor.u32 %s75, %s76
      %p78 = scmp.eq.s32.totalorder %s77, 0
      %s80 = sadd.s32 %s79, 1
      %s81 = scalar_select %p78, %s79, %s80
      %p84 = pneg %p78
      %p85 = scmp.eq.s32.totalorder %s20, 3
      %p86 = por %p84, %p85
      %p87 = scmp.ne.s32.totalorder %s79, %s82
      %p88 = scmp.eq.s32.totalorder %s20, 0
      %p89 = por %p87, %p88
      %p90 = scmp.ne.s32.totalorder %s79, %s82
      %p91 = scmp.eq.s32.totalorder %s25, 3
      %p92 = por %p90, %p91
      %p93 = scmp.ne.s32.totalorder %s82, %s83
      %p94 = scmp.eq.s32.totalorder %s25, 0
      %p95 = por %p93, %p94
      %p96 = scmp.ne.s32.totalorder %s82, %s83
      %p97 = scmp.eq.s32.totalorder %s26, 3
      %p98 = por %p96, %p97
      %p100 = scmp.ne.s32.totalorder %s83, %s99
      %p101 = scmp.eq.s32.totalorder %s26, 0
      %p102 = por %p100, %p101
      %s103 = ssub.s32 %s28, %s42
      %p104 = scmp.eq.s32.totalorder %s103, 0
      %s106 = sadd.s32 %s105, 1
      %s107 = scalar_select %p104, %s105, %s106
      %p110 = pneg %p104
      %p111 = scmp.eq.s32.totalorder %s20, 3
      %p112 = por %p110, %p111
      %p113 = scmp.ne.s32.totalorder %s105, %s108
      %p114 = scmp.eq.s32.totalorder %s20, 0
      %p115 = por %p113, %p114
      %p116 = scmp.ne.s32.totalorder %s105, %s108
      %p117 = scmp.eq.s32.totalorder %s25, 3
      %p118 = por %p116, %p117
      %p119 = scmp.ne.s32.totalorder %s108, %s109
      %p120 = scmp.eq.s32.totalorder %s25, 0
      %p121 = por %p119, %p120
      %p122 = scmp.ne.s32.totalorder %s108, %s109
      %p123 = scmp.eq.s32.totalorder %s26, 3
      %p124 = por %p122, %p123
      %p126 = scmp.ne.s32.totalorder %s109, %s125
      %p127 = scmp.eq.s32.totalorder %s26, 0
      %p128 = por %p126, %p127
      %s129 = ssub.s32 %s27, %s46
      %s130 = ssub.s32 %s28, %s42
      %s131 = sor.u32 %s129, %s130
      %p132 = scmp.eq.s32.totalorder %s131, 0
      %s134 = sadd.s32 %s133, 1
      %s135 = scalar_select %p132, %s133, %s134
      %p138 = pneg %p132
      %p139 = scmp.eq.s32.totalorder %s20, 3
      %p140 = por %p138, %p139
      %p141 = scmp.ne.s32.totalorder %s133, %s136
      %p142 = scmp.eq.s32.totalorder %s20, 0
      %p143 = por %p141, %p142
      %p144 = scmp.ne.s32.totalorder %s133, %s136
      %p145 = scmp.eq.s32.totalorder %s25, 3
      %p146 = por %p144, %p145
      %p147 = scmp.ne.s32.totalorder %s136, %s137
      %p148 = scmp.eq.s32.totalorder %s25, 0
      %p149 = por %p147, %p148
      %p150 = scmp.ne.s32.totalorder %s136, %s137
      %p151 = scmp.eq.s32.totalorder %s26, 3
      %p152 = por %p150, %p151
      %p154 = scmp.ne.s32.totalorder %s137, %s153
      %p155 = scmp.eq.s32.totalorder %s26, 0
      %p156 = por %p154, %p155
      %p157 = scmp.le.s32.totalorder 1, %s20
      %p158 = scmp.lt.s32.totalorder %s20, 5
      %p159 = pnand %p157, %p158
      %p160 = pneg %p159
      // Predicated region
      $region9: #{tpu_custom_call.1} parent=5 // pred_check
        _
      $region10: #{tpu_custom_call.1} parent=5 // pred_check_branch
        %162 = sbr.rel (%p159) target = $region12
      $region11: #{tpu_custom_call.1} parent=5 // pred_region
        %s163 = ssub.s32 %s20, 1
      $region12: #{tpu_custom_call.1} parent=5 // pred_fallthru
        _
      %p164 = scmp.lt.s32.totalorder %s20, 4
      // Predicated region
      $region13: #{tpu_custom_call.1} parent=5 // pred_check
        %p165 = pneg %p164
      $region14: #{tpu_custom_call.1} parent=5 // pred_check_branch
        %167 = sbr.rel (%p165) target = $region16
      $region15: #{tpu_custom_call.1} parent=5 // pred_region
        // Predicated region
        $region17: #{tpu_custom_call.1} parent=15 // pred_check
          %p168 = pneg %p61
        $region18: #{tpu_custom_call.1} parent=15 // pred_check_branch
          %170 = sbr.rel (%p168) target = $region20
        $region19: #{tpu_custom_call.1} parent=15 // pred_region
          %s171 = sand.u32 %s51, 1
          %s172 = scalar_lea.sflag [#allocation5], %s171
          %s173 = sand.u32 %s51, 1
          %s174 = smul.addr %s173, 64
          %s175 = scalar_lea.vmem [#allocation4], %s174
          %s176 = smul.u32 2, %s27
          %s177 = smul.u32 4, %s29
          %s179 = ssub.s32 1024, 1024
          %180 = vsyncadd %s172, %s179
          %s181 = smul.addr %s176, 8
          %s182 = sadd.s32 %s177, %s181
          %s183 = smul.addr %s182, 128
          %s184 = scalar_lea.hbm %s1, %s183
          %s185 = sshll.u32 %s175, 4
          %s186 = int_to_ptr.vmem [resolvable:$true] %s185
          %191 = dma.hbm_to_vmem [thread:$0]  %s184, 1024, %s186, %s172, 1024, 512, 32
        $region20: #{tpu_custom_call.1} parent=15 // pred_fallthru
          _
        // Predicated region
        $region21: #{tpu_custom_call.1} parent=15 // pred_check
          %p192 = pneg %p89
        $region22: #{tpu_custom_call.1} parent=15 // pred_check_branch
          %194 = sbr.rel (%p192) target = $region24
        $region23: #{tpu_custom_call.1} parent=15 // pred_region
          %s195 = sand.u32 %s20, 1
          %s196 = scalar_lea.sflag [#allocation8], %s195
          %s197 = sand.u32 %s79, 1
          %s198 = smul.addr %s197, 1024
          %s199 = scalar_lea.vmem [#allocation7], %s198
          %s200 = smul.u32 64, %s29
          %s201 = smul.u32 2, %s28
          %s203 = ssub.s32 16384, 16384
          %204 = vsyncadd %s196, %s203
          %s205 = smul.addr %s200, 4
          %s206 = sadd.s32 %s201, %s205
          %s207 = smul.addr %s206, 128
          %s208 = scalar_lea.hbm %s2, %s207
          %s209 = sshll.u32 %s199, 4
          %s210 = int_to_ptr.vmem [resolvable:$true] %s209
          %215 = dma.hbm_to_vmem [thread:$0]  %s208, 16384, %s210, %s196, 512, 256, 16
        $region24: #{tpu_custom_call.1} parent=15 // pred_fallthru
          _
        // Predicated region
        $region25: #{tpu_custom_call.1} parent=15 // pred_check
          %p216 = pneg %p115
        $region26: #{tpu_custom_call.1} parent=15 // pred_check_branch
          %218 = sbr.rel (%p216) target = $region28
        $region27: #{tpu_custom_call.1} parent=15 // pred_region
          %s219 = sand.u32 %s20, 1
          %s220 = scalar_lea.sflag [#allocation8], %s219
          %s221 = sand.u32 %s105, 1
          %s222 = smul.addr %s221, 2
          %s223 = scalar_lea.vmem [#allocation9], %s222
          %s224 = smul.u32 2, %s28
          %s226 = ssub.s32 32, 32
          %227 = vsyncadd %s220, %s226
          %s228 = smul.addr %s224, 16
          %s229 = scalar_lea.hbm %s3, %s228
          %s231 = sshll.u32 %s223, 4
          %s232 = int_to_ptr.vmem [resolvable:$true] %s231
          %234 = dma.hbm_to_vmem [thread:$0]  %s229, 32, %s232, %s220
        $region28: #{tpu_custom_call.1} parent=15 // pred_fallthru
          _
      $region16: #{tpu_custom_call.1} parent=5 // pred_fallthru
        _
      %p235 = scmp.le.s32.totalorder 1, %s20
      %p236 = scmp.lt.s32.totalorder %s20, 5
      %p237 = pnand %p235, %p236
      %p238 = pneg %p237
      // Predicated region
      $region29: #{tpu_custom_call.1} parent=5 // pred_check
        _
      $region30: #{tpu_custom_call.1} parent=5 // pred_check_branch
        %240 = sbr.rel (%p237) target = $region32
      $region31: #{tpu_custom_call.1} parent=5 // pred_region
        %s241 = ssub.s32 %s20, 1
        %s242 = sand.u32 %s54, 1
        %s243 = scalar_lea.sflag [#allocation5], %s242
        %s244 = sand.u32 %s54, 1
        %s245 = smul.addr %s244, 64
        %s246 = scalar_lea.vmem [#allocation4], %s245
        // Predicated region
        $region33: #{tpu_custom_call.1} parent=31 // pred_check
          %p247 = pneg %p67
        $region34: #{tpu_custom_call.1} parent=31 // pred_check_branch
          %249 = sbr.rel (%p247) target = $region36
        $region35: #{tpu_custom_call.1} parent=31 // pred_region
          %250 = dma.done %s243, 1024
        $region36: #{tpu_custom_call.1} parent=31 // pred_fallthru
          _
        %s251 = sand.u32 %s25, 1
        %s252 = scalar_lea.sflag [#allocation8], %s251
        %s253 = sand.u32 %s82, 1
        %s254 = smul.addr %s253, 1024
        %s255 = scalar_lea.vmem [#allocation7], %s254
        // Predicated region
        $region37: #{tpu_custom_call.1} parent=31 // pred_check
          %p256 = pneg %p95
        $region38: #{tpu_custom_call.1} parent=31 // pred_check_branch
          %258 = sbr.rel (%p256) target = $region40
        $region39: #{tpu_custom_call.1} parent=31 // pred_region
          %259 = dma.done %s252, 16384
        $region40: #{tpu_custom_call.1} parent=31 // pred_fallthru
          _
        %s260 = sand.u32 %s25, 1
        %s261 = scalar_lea.sflag [#allocation8], %s260
        %s262 = sand.u32 %s108, 1
        %s263 = smul.addr %s262, 2
        %s264 = scalar_lea.vmem [#allocation9], %s263
        // Predicated region
        $region41: #{tpu_custom_call.1} parent=31 // pred_check
          %p265 = pneg %p121
        $region42: #{tpu_custom_call.1} parent=31 // pred_check_branch
          %267 = sbr.rel (%p265) target = $region44
        $region43: #{tpu_custom_call.1} parent=31 // pred_region
          %268 = dma.done %s261, 32
        $region44: #{tpu_custom_call.1} parent=31 // pred_fallthru
          _
        %s269 = sand.u32 %s54, 1
        %s270 = scalar_lea.sflag [#allocation5], %s269
        %s271 = sand.u32 %s54, 1
        %s272 = smul.addr %s271, 64
        %s273 = scalar_lea.vmem [#allocation4], %s272
        %p274 = pneg %p67
        %p275 = pneg %p64
        %s276 = sand.u32 %s25, 1
        %s277 = scalar_lea.sflag [#allocation8], %s276
        %s278 = sand.u32 %s82, 1
        %s279 = smul.addr %s278, 1024
        %s280 = scalar_lea.vmem [#allocation7], %s279
        %p281 = pneg %p95
        %p282 = pneg %p92
        %s283 = sand.u32 %s25, 1
        %s284 = scalar_lea.sflag [#allocation8], %s283
        %s285 = sand.u32 %s108, 1
        %s286 = smul.addr %s285, 2
        %s287 = scalar_lea.vmem [#allocation9], %s286
        %p288 = pneg %p121
        %p289 = pneg %p118
        %p290 = pneg %p149
        %p291 = pneg %p146
        %s292 = sand.u32 %s136, 1
        %s293 = scalar_lea.sflag [#allocation6], %s292
        %s294 = sand.u32 %s136, 1
        %s295 = smul.addr %s294, 32
        %s296 = scalar_lea.vmem [#allocation10], %s295
        %s297 = smul.u32 2, %s30
        %s298 = smul.u32 4, %s32
        %s299 = smul.u32 64, %s32
        %s300 = smul.u32 2, %s31
        %s301 = smul.u32 2, %s31
        %s302 = smul.u32 2, %s30
        %s303 = smul.u32 2, %s31
        %p304 = scmp.eq.s32.totalorder %s32, 0
        // Predicated region
        $region45: #{tpu_custom_call.1} parent=31 // pred_check
          %p305 = pneg %p304
        $region46: #{tpu_custom_call.1} parent=31 // pred_check_branch
          %307 = sbr.rel (%p305) target = $region48
        $region47: #{tpu_custom_call.1} parent=31 // pred_region
          %308 = vst [vmem:[%s296] sm:$0xff] 0.0
          %309 = vst [vmem:[%s296 + $0x8] sm:$0xff] 0.0
          %310 = vst [vmem:[%s296 + $0x10] sm:$0xff] 0.0
          %311 = vst [vmem:[%s296 + $0x18] sm:$0xff] 0.0
        $region48: #{tpu_custom_call.1} parent=31 // pred_fallthru
          _
        %v312 = vld [vmem:[%s296] sm:$0xff]
        %v313 = vld [vmem:[%s296 + $0x8] sm:$0xff]
        %v314 = vld [vmem:[%s296 + $0x10] sm:$0xff]
        %v315 = vld [vmem:[%s296 + $0x18] sm:$0xff]
        %v316 = vld [vmem:[%s246] sm:$0xff]
        %v317 = vld [vmem:[%s246 + $0x8] sm:$0xff]
        %v318 = vld [vmem:[%s246 + $0x10] sm:$0xff]
        %v319 = vld [vmem:[%s246 + $0x18] sm:$0xff]
        %v320 = vld [vmem:[%s246 + $0x20] sm:$0xff]
        %v321 = vld [vmem:[%s246 + $0x28] sm:$0xff]
        %v322 = vld [vmem:[%s246 + $0x30] sm:$0xff]
        %v323 = vld [vmem:[%s246 + $0x38] sm:$0xff]
        %v324 = vld [vmem:[%s255] sm:$0xff]
        %v325 = vld [vmem:[%s255 + $0x8] sm:$0xff]
        %v326 = vld [vmem:[%s255 + $0x10] sm:$0xff]
        %v327 = vld [vmem:[%s255 + $0x18] sm:$0xff]
        %v328 = vld [vmem:[%s255 + $0x20] sm:$0xff]
        %v329 = vld [vmem:[%s255 + $0x28] sm:$0xff]
        %v330 = vld [vmem:[%s255 + $0x30] sm:$0xff]
        %v331 = vld [vmem:[%s255 + $0x38] sm:$0xff]
        %v332 = vld [vmem:[%s255 + $0x40] sm:$0xff]
        %v333 = vld [vmem:[%s255 + $0x48] sm:$0xff]
        %v334 = vld [vmem:[%s255 + $0x50] sm:$0xff]
        %v335 = vld [vmem:[%s255 + $0x58] sm:$0xff]
        %v336 = vld [vmem:[%s255 + $0x60] sm:$0xff]
        %v337 = vld [vmem:[%s255 + $0x68] sm:$0xff]
        %v338 = vld [vmem:[%s255 + $0x70] sm:$0xff]
        %v339 = vld [vmem:[%s255 + $0x78] sm:$0xff]
        %v340 = vld [vmem:[%s255 + $0x80] sm:$0xff]
        %v341 = vld [vmem:[%s255 + $0x88] sm:$0xff]
        %v342 = vld [vmem:[%s255 + $0x90] sm:$0xff]
        %v343 = vld [vmem:[%s255 + $0x98] sm:$0xff]
        %v344 = vld [vmem:[%s255 + $0xa0] sm:$0xff]
        %v345 = vld [vmem:[%s255 + $0xa8] sm:$0xff]
        %v346 = vld [vmem:[%s255 + $0xb0] sm:$0xff]
        %v347 = vld [vmem:[%s255 + $0xb8] sm:$0xff]
        %v348 = vld [vmem:[%s255 + $0xc0] sm:$0xff]
        %v349 = vld [vmem:[%s255 + $0xc8] sm:$0xff]
        %v350 = vld [vmem:[%s255 + $0xd0] sm:$0xff]
        %v351 = vld [vmem:[%s255 + $0xd8] sm:$0xff]
        %v352 = vld [vmem:[%s255 + $0xe0] sm:$0xff]
        %v353 = vld [vmem:[%s255 + $0xe8] sm:$0xff]
        %v354 = vld [vmem:[%s255 + $0xf0] sm:$0xff]
        %v355 = vld [vmem:[%s255 + $0xf8] sm:$0xff]
        %v356 = vld [vmem:[%s255 + $0x100] sm:$0xff]
        %v357 = vld [vmem:[%s255 + $0x108] sm:$0xff]
        %v358 = vld [vmem:[%s255 + $0x110] sm:$0xff]
        %v359 = vld [vmem:[%s255 + $0x118] sm:$0xff]
        %v360 = vld [vmem:[%s255 + $0x120] sm:$0xff]
        %v361 = vld [vmem:[%s255 + $0x128] sm:$0xff]
        %v362 = vld [vmem:[%s255 + $0x130] sm:$0xff]
        %v363 = vld [vmem:[%s255 + $0x138] sm:$0xff]
        %v364 = vld [vmem:[%s255 + $0x140] sm:$0xff]
        %v365 = vld [vmem:[%s255 + $0x148] sm:$0xff]
        %v366 = vld [vmem:[%s255 + $0x150] sm:$0xff]
        %v367 = vld [vmem:[%s255 + $0x158] sm:$0xff]
        %v368 = vld [vmem:[%s255 + $0x160] sm:$0xff]
        %v369 = vld [vmem:[%s255 + $0x168] sm:$0xff]
        %v370 = vld [vmem:[%s255 + $0x170] sm:$0xff]
        %v371 = vld [vmem:[%s255 + $0x178] sm:$0xff]
        %v372 = vld [vmem:[%s255 + $0x180] sm:$0xff]
        %v373 = vld [vmem:[%s255 + $0x188] sm:$0xff]
        %v374 = vld [vmem:[%s255 + $0x190] sm:$0xff]
        %v375 = vld [vmem:[%s255 + $0x198] sm:$0xff]
        %v376 = vld [vmem:[%s255 + $0x1a0] sm:$0xff]
        %v377 = vld [vmem:[%s255 + $0x1a8] sm:$0xff]
        %v378 = vld [vmem:[%s255 + $0x1b0] sm:$0xff]
        %v379 = vld [vmem:[%s255 + $0x1b8] sm:$0xff]
        %v380 = vld [vmem:[%s255 + $0x1c0] sm:$0xff]
        %v381 = vld [vmem:[%s255 + $0x1c8] sm:$0xff]
        %v382 = vld [vmem:[%s255 + $0x1d0] sm:$0xff]
        %v383 = vld [vmem:[%s255 + $0x1d8] sm:$0xff]
        %v384 = vld [vmem:[%s255 + $0x1e0] sm:$0xff]
        %v385 = vld [vmem:[%s255 + $0x1e8] sm:$0xff]
        %v386 = vld [vmem:[%s255 + $0x1f0] sm:$0xff]
        %v387 = vld [vmem:[%s255 + $0x1f8] sm:$0xff]
        %v388 = vld [vmem:[%s255 + $0x200] sm:$0xff]
        %v389 = vld [vmem:[%s255 + $0x208] sm:$0xff]
        %v390 = vld [vmem:[%s255 + $0x210] sm:$0xff]
        %v391 = vld [vmem:[%s255 + $0x218] sm:$0xff]
        %v392 = vld [vmem:[%s255 + $0x220] sm:$0xff]
        %v393 = vld [vmem:[%s255 + $0x228] sm:$0xff]
        %v394 = vld [vmem:[%s255 + $0x230] sm:$0xff]
        %v395 = vld [vmem:[%s255 + $0x238] sm:$0xff]
        %v396 = vld [vmem:[%s255 + $0x240] sm:$0xff]
        %v397 = vld [vmem:[%s255 + $0x248] sm:$0xff]
        %v398 = vld [vmem:[%s255 + $0x250] sm:$0xff]
        %v399 = vld [vmem:[%s255 + $0x258] sm:$0xff]
        %v400 = vld [vmem:[%s255 + $0x260] sm:$0xff]
        %v401 = vld [vmem:[%s255 + $0x268] sm:$0xff]
        %v402 = vld [vmem:[%s255 + $0x270] sm:$0xff]
        %v403 = vld [vmem:[%s255 + $0x278] sm:$0xff]
        %v404 = vld [vmem:[%s255 + $0x280] sm:$0xff]
        %v405 = vld [vmem:[%s255 + $0x288] sm:$0xff]
        %v406 = vld [vmem:[%s255 + $0x290] sm:$0xff]
        %v407 = vld [vmem:[%s255 + $0x298] sm:$0xff]
        %v408 = vld [vmem:[%s255 + $0x2a0] sm:$0xff]
        %v409 = vld [vmem:[%s255 + $0x2a8] sm:$0xff]
        %v410 = vld [vmem:[%s255 + $0x2b0] sm:$0xff]
        %v411 = vld [vmem:[%s255 + $0x2b8] sm:$0xff]
        %v412 = vld [vmem:[%s255 + $0x2c0] sm:$0xff]
        %v413 = vld [vmem:[%s255 + $0x2c8] sm:$0xff]
        %v414 = vld [vmem:[%s255 + $0x2d0] sm:$0xff]
        %v415 = vld [vmem:[%s255 + $0x2d8] sm:$0xff]
        %v416 = vld [vmem:[%s255 + $0x2e0] sm:$0xff]
        %v417 = vld [vmem:[%s255 + $0x2e8] sm:$0xff]
        %v418 = vld [vmem:[%s255 + $0x2f0] sm:$0xff]
        %v419 = vld [vmem:[%s255 + $0x2f8] sm:$0xff]
        %v420 = vld [vmem:[%s255 + $0x300] sm:$0xff]
        %v421 = vld [vmem:[%s255 + $0x308] sm:$0xff]
        %v422 = vld [vmem:[%s255 + $0x310] sm:$0xff]
        %v423 = vld [vmem:[%s255 + $0x318] sm:$0xff]
        %v424 = vld [vmem:[%s255 + $0x320] sm:$0xff]
        %v425 = vld [vmem:[%s255 + $0x328] sm:$0xff]
        %v426 = vld [vmem:[%s255 + $0x330] sm:$0xff]
        %v427 = vld [vmem:[%s255 + $0x338] sm:$0xff]
        %v428 = vld [vmem:[%s255 + $0x340] sm:$0xff]
        %v429 = vld [vmem:[%s255 + $0x348] sm:$0xff]
        %v430 = vld [vmem:[%s255 + $0x350] sm:$0xff]
        %v431 = vld [vmem:[%s255 + $0x358] sm:$0xff]
        %v432 = vld [vmem:[%s255 + $0x360] sm:$0xff]
        %v433 = vld [vmem:[%s255 + $0x368] sm:$0xff]
        %v434 = vld [vmem:[%s255 + $0x370] sm:$0xff]
        %v435 = vld [vmem:[%s255 + $0x378] sm:$0xff]
        %v436 = vld [vmem:[%s255 + $0x380] sm:$0xff]
        %v437 = vld [vmem:[%s255 + $0x388] sm:$0xff]
        %v438 = vld [vmem:[%s255 + $0x390] sm:$0xff]
        %v439 = vld [vmem:[%s255 + $0x398] sm:$0xff]
        %v440 = vld [vmem:[%s255 + $0x3a0] sm:$0xff]
        %v441 = vld [vmem:[%s255 + $0x3a8] sm:$0xff]
        %v442 = vld [vmem:[%s255 + $0x3b0] sm:$0xff]
        %v443 = vld [vmem:[%s255 + $0x3b8] sm:$0xff]
        %v444 = vld [vmem:[%s255 + $0x3c0] sm:$0xff]
        %v445 = vld [vmem:[%s255 + $0x3c8] sm:$0xff]
        %v446 = vld [vmem:[%s255 + $0x3d0] sm:$0xff]
        %v447 = vld [vmem:[%s255 + $0x3d8] sm:$0xff]
        %v448 = vld [vmem:[%s255 + $0x3e0] sm:$0xff]
        %v449 = vld [vmem:[%s255 + $0x3e8] sm:$0xff]
        %v450 = vld [vmem:[%s255 + $0x3f0] sm:$0xff]
        %v451 = vld [vmem:[%s255 + $0x3f8] sm:$0xff]
        %452 = vmatprep.subr.mxu0 %v355
        %453 = vmatpush1.msra.mxu0 %v354
        %454 = vmatprep.subr.mxu0 %v353
        %455 = vmatpush1.msra.mxu0 %v352
        %456 = vmatprep.subr.mxu0 %v351
        %457 = vmatpush1.msra.mxu0 %v350
        %458 = vmatprep.subr.mxu0 %v349
        %459 = vmatpush1.msra.mxu0 %v348
        %460 = vmatprep.subr.mxu0 %v347
        %461 = vmatpush1.msra.mxu0 %v346
        %462 = vmatprep.subr.mxu0 %v345
        %463 = vmatpush1.msra.mxu0 %v344
        %464 = vmatprep.subr.mxu0 %v343
        %465 = vmatpush1.msra.mxu0 %v342
        %466 = vmatprep.subr.mxu0 %v341
        %467 = vmatpush1.msra.mxu0 %v340
        %468 = vmatprep.subr.mxu0 %v339
        %469 = vmatpush1.msra.mxu0 %v338
        %470 = vmatprep.subr.mxu0 %v337
        %471 = vmatpush1.msra.mxu0 %v336
        %472 = vmatprep.subr.mxu0 %v335
        %473 = vmatpush1.msra.mxu0 %v334
        %474 = vmatprep.subr.mxu0 %v333
        %475 = vmatpush1.msra.mxu0 %v332
        %476 = vmatprep.subr.mxu0 %v331
        %477 = vmatpush1.msra.mxu0 %v330
        %478 = vmatprep.subr.mxu0 %v329
        %479 = vmatpush1.msra.mxu0 %v328
        %480 = vmatprep.subr.mxu0 %v327
        %481 = vmatpush1.msra.mxu0 %v326
        %482 = vmatprep.subr.mxu0 %v325
        %483 = vmatpush1.msra.mxu0 %v324
        %484 = vmatprep.subr.mxu0 %v387
        %485 = vmatpush2.msra.mxu0 %v386
        %486 = vmatprep.subr.mxu0 %v385
        %487 = vmatpush2.msra.mxu0 %v384
        %488 = vmatprep.subr.mxu0 %v383
        %489 = vmatpush2.msra.mxu0 %v382
        %490 = vmatprep.subr.mxu0 %v381
        %491 = vmatpush2.msra.mxu0 %v380
        %492 = vmatprep.subr.mxu0 %v379
        %493 = vmatpush2.msra.mxu0 %v378
        %494 = vmatprep.subr.mxu0 %v377
        %495 = vmatpush2.msra.mxu0 %v376
        %496 = vmatprep.subr.mxu0 %v375
        %497 = vmatpush2.msra.mxu0 %v374
        %498 = vmatprep.subr.mxu0 %v373
        %499 = vmatpush2.msra.mxu0 %v372
        %500 = vmatprep.subr.mxu0 %v371
        %501 = vmatpush2.msra.mxu0 %v370
        %502 = vmatprep.subr.mxu0 %v369
        %503 = vmatpush2.msra.mxu0 %v368
        %504 = vmatprep.subr.mxu0 %v367
        %505 = vmatpush2.msra.mxu0 %v366
        %506 = vmatprep.subr.mxu0 %v365
        %507 = vmatpush2.msra.mxu0 %v364
        %508 = vmatprep.subr.mxu0 %v363
        %509 = vmatpush2.msra.mxu0 %v362
        %510 = vmatprep.subr.mxu0 %v361
        %511 = vmatpush2.msra.mxu0 %v360
        %512 = vmatprep.subr.mxu0 %v359
        %513 = vmatpush2.msra.mxu0 %v358
        %514 = vmatprep.subr.mxu0 %v357
        %515 = vmatpush2.msra.mxu0 %v356
        %516 = vmatprep.mubr.f32.mxu0 %v317
        %517 = vmatmul.mubr.f32.gmra.mxu0 %v316
        %v518 = vpop.f32.mrf.mxu0
        %v519 = vadd.f32 0.0, %v518
        %v520 = vpop.f32.mrf.mxu0
        %v521 = vadd.f32 0.0, %v520
        %522 = vmatprep.mubr.f32.mxu0 %v321
        %523 = vmatmul.mubr.f32.gmra.mxu0 %v320
        %v524 = vpop.f32.mrf.mxu0
        %v525 = vadd.f32 0.0, %v524
        %v526 = vpop.f32.mrf.mxu0
        %v527 = vadd.f32 0.0, %v526
        %528 = vdwg.mxu0
        %529 = vmatprep.subr.mxu0 %v419
        %530 = vmatpush1.msra.mxu0 %v418
        %531 = vmatprep.subr.mxu0 %v417
        %532 = vmatpush1.msra.mxu0 %v416
        %533 = vmatprep.subr.mxu0 %v415
        %534 = vmatpush1.msra.mxu0 %v414
        %535 = vmatprep.subr.mxu0 %v413
        %536 = vmatpush1.msra.mxu0 %v412
        %537 = vmatprep.subr.mxu0 %v411
        %538 = vmatpush1.msra.mxu0 %v410
        %539 = vmatprep.subr.mxu0 %v409
        %540 = vmatpush1.msra.mxu0 %v408
        %541 = vmatprep.subr.mxu0 %v407
        %542 = vmatpush1.msra.mxu0 %v406
        %543 = vmatprep.subr.mxu0 %v405
        %544 = vmatpush1.msra.mxu0 %v404
        %545 = vmatprep.subr.mxu0 %v403
        %546 = vmatpush1.msra.mxu0 %v402
        %547 = vmatprep.subr.mxu0 %v401
        %548 = vmatpush1.msra.mxu0 %v400
        %549 = vmatprep.subr.mxu0 %v399
        %550 = vmatpush1.msra.mxu0 %v398
        %551 = vmatprep.subr.mxu0 %v397
        %552 = vmatpush1.msra.mxu0 %v396
        %553 = vmatprep.subr.mxu0 %v395
        %554 = vmatpush1.msra.mxu0 %v394
        %555 = vmatprep.subr.mxu0 %v393
        %556 = vmatpush1.msra.mxu0 %v392
        %557 = vmatprep.subr.mxu0 %v391
        %558 = vmatpush1.msra.mxu0 %v390
        %559 = vmatprep.subr.mxu0 %v389
        %560 = vmatpush1.msra.mxu0 %v388
        %561 = vmatprep.subr.mxu0 %v451
        %562 = vmatpush2.msra.mxu0 %v450
        %563 = vmatprep.subr.mxu0 %v449
        %564 = vmatpush2.msra.mxu0 %v448
        %565 = vmatprep.subr.mxu0 %v447
        %566 = vmatpush2.msra.mxu0 %v446
        %567 = vmatprep.subr.mxu0 %v445
        %568 = vmatpush2.msra.mxu0 %v444
        %569 = vmatprep.subr.mxu0 %v443
        %570 = vmatpush2.msra.mxu0 %v442
        %571 = vmatprep.subr.mxu0 %v441
        %572 = vmatpush2.msra.mxu0 %v440
        %573 = vmatprep.subr.mxu0 %v439
        %574 = vmatpush2.msra.mxu0 %v438
        %575 = vmatprep.subr.mxu0 %v437
        %576 = vmatpush2.msra.mxu0 %v436
        %577 = vmatprep.subr.mxu0 %v435
        %578 = vmatpush2.msra.mxu0 %v434
        %579 = vmatprep.subr.mxu0 %v433
        %580 = vmatpush2.msra.mxu0 %v432
        %581 = vmatprep.subr.mxu0 %v431
        %582 = vmatpush2.msra.mxu0 %v430
        %583 = vmatprep.subr.mxu0 %v429
        %584 = vmatpush2.msra.mxu0 %v428
        %585 = vmatprep.subr.mxu0 %v427
        %586 = vmatpush2.msra.mxu0 %v426
        %587 = vmatprep.subr.mxu0 %v425
        %588 = vmatpush2.msra.mxu0 %v424
        %589 = vmatprep.subr.mxu0 %v423
        %590 = vmatpush2.msra.mxu0 %v422
        %591 = vmatprep.subr.mxu0 %v421
        %592 = vmatpush2.msra.mxu0 %v420
        %593 = vmatprep.mubr.f32.mxu0 %v319
        %594 = vmatmul.mubr.f32.gmra.mxu0 %v318
        %v595 = vpop.f32.mrf.mxu0
        %v596 = vadd.f32 %v519, %v595
        %v597 = vpop.f32.mrf.mxu0
        %v598 = vadd.f32 %v521, %v597
        %599 = vmatprep.mubr.f32.mxu0 %v323
        %600 = vmatmul.mubr.f32.gmra.mxu0 %v322
        %v601 = vpop.f32.mrf.mxu0
        %v602 = vadd.f32 %v525, %v601
        %v603 = vpop.f32.mrf.mxu0
        %v604 = vadd.f32 %v527, %v603
        %605 = vdwg.mxu0
        %v606 = vadd.f32 %v312, %v596
        %v607 = vadd.f32 %v313, %v598
        %v608 = vadd.f32 %v314, %v602
        %v609 = vadd.f32 %v315, %v604
        %610 = vst [vmem:[%s296] sm:$0xff] %v606
        %611 = vst [vmem:[%s296 + $0x8] sm:$0xff] %v607
        %612 = vst [vmem:[%s296 + $0x10] sm:$0xff] %v608
        %613 = vst [vmem:[%s296 + $0x18] sm:$0xff] %v609
        %p614 = scmp.eq.s32.totalorder %s32, 1
        // Predicated region
        $region49: #{tpu_custom_call.1} parent=31 // pred_check
          %p615 = pneg %p614
        $region50: #{tpu_custom_call.1} parent=31 // pred_check_branch
          %617 = sbr.rel (%p615) target = $region52
        $region51: #{tpu_custom_call.1} parent=31 // pred_region
          %v618 = vld [vmem:[%s296] sm:$0xff]
          %v619 = vld [vmem:[%s296 + $0x8] sm:$0xff]
          %v620 = vld [vmem:[%s296 + $0x10] sm:$0xff]
          %v621 = vld [vmem:[%s296 + $0x18] sm:$0xff]
          %v622 = vld [vmem:[%s264] sm:$0x3]
          %v624 = vlaneseq
          %v625 = vshrl.u32 %v624, 7
          %v626 = vsub.s32 0, %v625
          %v627 = vrot.slane %v622, %v626
          %v628 = vlaneseq
          %v629 = vshrl.u32 %v628, 7
          %v630 = vsub.s32 1, %v629
          %v631 = vrot.slane %v622, %v630
          %v634 = vadd.f32 %v618, %v627
          %v635 = vadd.f32 %v619, %v631
          %v636 = vadd.f32 %v620, %v627
          %v637 = vadd.f32 %v621, %v631
          %638 = vst [vmem:[%s296] sm:$0xff] %v634
          %639 = vst [vmem:[%s296 + $0x8] sm:$0xff] %v635
          %640 = vst [vmem:[%s296 + $0x10] sm:$0xff] %v636
          %641 = vst [vmem:[%s296 + $0x18] sm:$0xff] %v637
        $region52: #{tpu_custom_call.1} parent=31 // pred_fallthru
          _
        %s642 = sand.u32 %s136, 1
        %s643 = scalar_lea.sflag [#allocation6], %s642
        %s644 = sand.u32 %s136, 1
        %s645 = smul.addr %s644, 32
        %s646 = scalar_lea.vmem [#allocation10], %s645
        // Predicated region
        $region53: #{tpu_custom_call.1} parent=31 // pred_check
          %p647 = pneg %p146
        $region54: #{tpu_custom_call.1} parent=31 // pred_check_branch
          %649 = sbr.rel (%p647) target = $region56
        $region55: #{tpu_custom_call.1} parent=31 // pred_region
          %s650 = smul.u32 2, %s30
          %s651 = smul.u32 2, %s31
          %s653 = ssub.s32 512, 512
          %654 = vsyncadd %s643, %s653
          %s655 = smul.addr %s650, 4
          %s656 = sadd.s32 %s651, %s655
          %s657 = smul.addr %s656, 128
          %s658 = scalar_lea.hbm %s4, %s657
          %s659 = sshll.u32 %s646, 4
          %s660 = int_to_ptr.vmem [resolvable:$true] %s659
          %665 = dma.vmem_to_hbm [thread:$0]  %s660, 512, %s658, %s643, 256, 512, 16
        $region56: #{tpu_custom_call.1} parent=31 // pred_fallthru
          _
      $region32: #{tpu_custom_call.1} parent=5 // pred_fallthru
        _
      %p666 = scmp.le.s32.totalorder 2, %s20
      // Predicated region
      $region57: #{tpu_custom_call.1} parent=5 // pred_check
        %p667 = pneg %p666
      $region58: #{tpu_custom_call.1} parent=5 // pred_check_branch
        %669 = sbr.rel (%p667) target = $region60
      $region59: #{tpu_custom_call.1} parent=5 // pred_region
        %s670 = ssub.s32 %s20, 2
        // Predicated region
        $region61: #{tpu_custom_call.1} parent=59 // pred_check
          %p671 = pneg %p152
        $region62: #{tpu_custom_call.1} parent=59 // pred_check_branch
          %673 = sbr.rel (%p671) target = $region64
        $region63: #{tpu_custom_call.1} parent=59 // pred_region
          %s674 = sand.u32 %s137, 1
          %s675 = scalar_lea.sflag [#allocation6], %s674
          %s676 = sand.u32 %s137, 1
          %s677 = smul.addr %s676, 32
          %s678 = scalar_lea.vmem [#allocation10], %s677
          %679 = dma.done %s675, 512
        $region64: #{tpu_custom_call.1} parent=59 // pred_fallthru
          _
      $region60: #{tpu_custom_call.1} parent=5 // pred_fallthru
        _
    $region6: #{tpu_custom_call.1} parent=1 // loop_footer
      %s24 = sadd.s32 1, %s20
    $region7: #{tpu_custom_call.1} parent=1 // loop_footer_branch
      %19 = sbr.rel target = $region3
    $region8: #{tpu_custom_call.1} parent=1 // loop_exit
      _
    %680 = vsyncpa [#allocation5], 1
    %s681 = scalar_lea.sflag [#allocation5], 1
    %682 = vsyncpa %s681, 1
    %683 = vsyncpa [#allocation8], 1
    %s684 = scalar_lea.sflag [#allocation8], 1
    %685 = vsyncpa %s684, 1
    %686 = vsyncpa [#allocation6], 1
    %s687 = scalar_lea.sflag [#allocation6], 1
    %688 = vsyncpa %s687, 1

</llo_original>
